<compile_context>
chip_gen: v5e
topology: v5e:2x2
jax: 0.10.0
libtpu: 0.0.40
codegen_flags: <defaults>
</compile_context>

<pallas_src>
import jax
import jax.numpy as jnp
from jax.experimental import pallas as pl
from jax.experimental.pallas import tpu as pltpu

BLANK_LABEL = 27.0             # padding_value used by pad_packed_sequence
EPS = 1e-5                     # BatchNorm1d default eps
VMEM_LIMIT_BYTES = 48 * 1024 * 1024   # <= v7x 64 MiB physical, with headroom


# --------------------------------------------------------------------------
# Pass 1: BN-folded input projection (one bf16 GEMM per row chunk).
# --------------------------------------------------------------------------
def _proj_kernel(x_ref, wi_ref, b_ref, pre_ref):
    pre_ref[...] = (
        jnp.dot(x_ref[...], wi_ref[...], preferred_element_type=jnp.float32)
        + b_ref[...])


# --------------------------------------------------------------------------
# Pass 2: bidirectional LSTM recurrence over streamed pre-gate chunks.
# --------------------------------------------------------------------------
def _recurrence_kernel(mask_f_ref, mask_r_ref, pre_f_ref, pre_r_ref, wh_ref,
                       out_f_ref, out_r_ref, h_ref, c_ref):
    t_blk, n_blk, hp = out_f_ref.shape
    ti = pl.program_id(1)                     # time-chunk index ("arbitrary")

    @pl.when(ti == 0)
    def _():                                  # new batch chunk: reset state
        h_ref[...] = jnp.zeros_like(h_ref)
        c_ref[...] = jnp.zeros_like(c_ref)

    def lstm_gates(g, c):
        i = jax.nn.sigmoid(g[:, 0:hp])
        f = jax.nn.sigmoid(g[:, hp:2 * hp])
        gg = jnp.tanh(g[:, 2 * hp:3 * hp])
        o = jax.nn.sigmoid(g[:, 3 * hp:4 * hp])
        c_new = f * c + i * gg
        h_new = o * jnp.tanh(c_new)
        return h_new, c_new

    def body(j, carry):
        h_f, c_f, h_r, c_r = carry            # (n_blk, hp) f32 each
        jr = t_blk - 1 - j

        m_f = mask_f_ref[j]                   # (n_blk, 1): 1.0 iff t < length
        m_r = mask_r_ref[jr]

        # One fused recurrent matmul for BOTH directions (block-diagonal wh):
        # bf16 operands on the MXU, f32 accumulation; state stays f32.
        h_cat = jnp.concatenate([h_f, h_r], axis=-1).astype(jnp.bfloat16)
        g_all = jnp.dot(h_cat, wh_ref[...],
                        preferred_element_type=jnp.float32)   # (n_blk, 8hp)
        g_f = g_all[:, :4 * hp] + pre_f_ref[j]
        g_r = g_all[:, 4 * hp:] + pre_r_ref[jr]

        hf_new, cf_new = lstm_gates(g_f, c_f)
        hr_new, cr_new = lstm_gates(g_r, c_r)

        # pack_padded_sequence emulation: freeze state / emit blank on padding.
        h_f = h_f + m_f * (hf_new - h_f)
        c_f = c_f + m_f * (cf_new - c_f)
        h_r = h_r + m_r * (hr_new - h_r)
        c_r = c_r + m_r * (cr_new - c_r)

        out_f_ref[j] = m_f * h_f + (1.0 - m_f) * BLANK_LABEL
        out_r_ref[jr] = m_r * h_r + (1.0 - m_r) * BLANK_LABEL
        return h_f, c_f, h_r, c_r

    carry0 = (h_ref[:, :hp], c_ref[:, :hp], h_ref[:, hp:], c_ref[:, hp:])
    h_f, c_f, h_r, c_r = jax.lax.fori_loop(0, t_blk, body, carry0, unroll=2)
    h_ref[:, :hp] = h_f
    h_ref[:, hp:] = h_r
    c_ref[:, :hp] = c_f
    c_ref[:, hp:] = c_r


# --------------------------------------------------------------------------
# Wrapper
# --------------------------------------------------------------------------
def _round_up(v, m):
    return (v + m - 1) // m * m


def _pad_gate_dim(a, h, hp):
    """Zero-pad a trailing axis laid out as consecutive H-sized gate blocks so
    that each gate block becomes Hp wide (gate-aware padding)."""
    if hp == h:
        return a
    lead = a.shape[:-1]
    k = a.shape[-1] // h
    a = a.reshape(lead + (k, h))
    a = jnp.pad(a, [(0, 0)] * (len(lead) + 1) + [(0, hp - h)])
    return a.reshape(lead + (k * hp,))


def batch_rnn_forward(x, output_lengths, params, *, t_blk=4, n_blk=8):
    T, N, F = x.shape
    H = params["wh_f"].shape[0]
    f32 = jnp.float32

    Hp = _round_up(H, 128)          # lane-dense hidden dim
    Np = _round_up(N, n_blk)        # sublane-dense batch dim
    Tp = _round_up(T, t_blk)
    n_tc = Tp // t_blk
    n_bc = Np // n_blk

    # --- SequenceWise(BatchNorm1d) folded into the projection: stats over the
    #     T*N rows (biased variance, training-mode forward), computed here.
    gamma = params["gamma"].reshape(F)
    beta = params["beta"].reshape(F)
    mean = jnp.mean(x, axis=(0, 1))
    var = jnp.mean(jnp.square(x - mean), axis=(0, 1))
    scale = gamma * jax.lax.rsqrt(var + EPS)                       # (F,)
    shift = beta - mean * scale                                    # (F,)

    wi = jnp.concatenate([params["wi_f"], params["wi_r"]], axis=1)  # (F, 8H)
    b = jnp.concatenate([params["b_f"], params["b_r"]], axis=1)     # (1, 8H)
    wi_fold = _pad_gate_dim(scale[:, None] * wi, H, Hp).astype(jnp.bfloat16)
    b_fold = _pad_gate_dim(shift[None, :] @ wi + b, H, Hp).astype(f32)

    # --- Block-diagonal bf16 recurrent weight: concat(h_f, h_r) @ wh_bd gives
    #     both directions' gate pre-activations in one MXU matmul.
    def pad_wh(w):                                  # (H, 4H) -> (Hp, 4Hp)
        w = _pad_gate_dim(w, H, Hp)
        return jnp.pad(w, ((0, Hp - H), (0, 0)))

    wh_bd = jnp.zeros((2 * Hp, 8 * Hp), f32)
    wh_bd = wh_bd.at[:Hp, :4 * Hp].set(pad_wh(params["wh_f"]))
    wh_bd = wh_bd.at[Hp:, 4 * Hp:].set(pad_wh(params["wh_r"]))
    wh_bd = wh_bd.astype(jnp.bfloat16)

    # --- Lane/sublane-dense padding of activations; precomputed validity mask.
    xp = jnp.pad(x, ((0, Tp - T), (0, Np - N), (0, 0))).astype(jnp.bfloat16)
    x2 = xp.reshape(Tp * Np, F)
    lens = jnp.pad(output_lengths.astype(jnp.int32), (0, Np - N))
    mask = (jnp.arange(Tp, dtype=jnp.int32)[:, None] < lens[None, :])
    mask = mask.astype(f32)[..., None]                              # (Tp,Np,1)

    # ---------------- Pass 1: pipelined BN-folded projection GEMM ----------
    rows = t_blk * Np
    proj_cost = pl.CostEstimate(
        flops=2 * Tp * Np * F * 8 * Hp,
        transcendentals=0,
        bytes_accessed=2 * x2.size + 2 * wi_fold.size + 4 * b_fold.size
                       + 4 * Tp * Np * 8 * Hp)
    pre = pl.pallas_call(
        _proj_kernel,
        out_shape=jax.ShapeDtypeStruct((Tp * Np, 8 * Hp), f32),
        grid=(n_tc,),
        in_specs=[pl.BlockSpec((rows, F), lambda i: (i, 0)),
                  pl.BlockSpec((F, 8 * Hp), lambda i: (0, 0)),
                  pl.BlockSpec((1, 8 * Hp), lambda i: (0, 0))],
        out_specs=pl.BlockSpec((rows, 8 * Hp), lambda i: (i, 0)),
        compiler_params=pltpu.CompilerParams(
            dimension_semantics=("parallel",),
            vmem_limit_bytes=VMEM_LIMIT_BYTES),
        cost_estimate=proj_cost,
    )(x2, wi_fold, b_fold)
    pre = pre.reshape(Tp, Np, 8 * Hp)       # [fwd gates | rev gates] per step

    # ---------------- Pass 2: streamed bidirectional recurrence ------------
    rec_cost = pl.CostEstimate(
        flops=2 * Tp * Np * (2 * Hp) * (8 * Hp) + 48 * Tp * Np * Hp,
        transcendentals=10 * Tp * Np * Hp,
        bytes_accessed=4 * pre.size + 8 * mask.size + 2 * wh_bd.size
                       + 8 * Tp * Np * Hp)

    out_f, out_r = pl.pallas_call(
        _recurrence_kernel,
        out_shape=(jax.ShapeDtypeStruct((Tp, Np, Hp), f32),
                   jax.ShapeDtypeStruct((Tp, Np, Hp), f32)),
        grid=(n_bc, n_tc),
        in_specs=[
            # mask: forward-time chunks, then reverse-time chunks
            pl.BlockSpec((t_blk, n_blk, 1), lambda bi, ti: (ti, bi, 0)),
            pl.BlockSpec((t_blk, n_blk, 1),
                         lambda bi, ti: (n_tc - 1 - ti, bi, 0)),
            # pre-gates: forward half (cols [0,4Hp)) streamed front-to-back,
            # reverse half (cols [4Hp,8Hp)) streamed back-to-front
            pl.BlockSpec((t_blk, n_blk, 4 * Hp), lambda bi, ti: (ti, bi, 0)),
            pl.BlockSpec((t_blk, n_blk, 4 * Hp),
                         lambda bi, ti: (n_tc - 1 - ti, bi, 1)),
            # block-diagonal recurrent weight: resident for the whole pass
            pl.BlockSpec((2 * Hp, 8 * Hp), lambda bi, ti: (0, 0)),
        ],
        out_specs=(
            pl.BlockSpec((t_blk, n_blk, Hp), lambda bi, ti: (ti, bi, 0)),
            pl.BlockSpec((t_blk, n_blk, Hp),
                         lambda bi, ti: (n_tc - 1 - ti, bi, 0)),
        ),
        scratch_shapes=[pltpu.VMEM((n_blk, 2 * Hp), f32),   # h = [h_f | h_r]
                        pltpu.VMEM((n_blk, 2 * Hp), f32)],  # c = [c_f | c_r]
        compiler_params=pltpu.CompilerParams(
            dimension_semantics=("parallel", "arbitrary"),
            vmem_limit_bytes=VMEM_LIMIT_BYTES),
        cost_estimate=rec_cost,
    )(mask, mask, pre, pre, wh_bd)

    # Direction sum + un-pad.  Padded timesteps end up as 2*blank_label, which
    # matches pad_packed_sequence(padding_value=blank_label) + sum over dirs.
    return (out_f + out_r)[:T, :N, :H]


# --------------------------------------------------------------------------
# Parameters / pure-JAX reference
# --------------------------------------------------------------------------
def init_params(key, input_size, hidden_size):
    """Deterministic synthetic init matching PyTorch LSTM/BatchNorm shapes."""
    k = 1.0 / jnp.sqrt(jnp.float32(hidden_size))
    keys = jax.random.split(key, 8)

    def u(kk, shape):
        return jax.random.uniform(kk, shape, jnp.float32, -k, k)

    wi_f = u(keys[0], (4 * hidden_size, input_size))   # weight_ih_l0
    wh_f = u(keys[1], (4 * hidden_size, hidden_size))  # weight_hh_l0
    b_if = u(keys[2], (4 * hidden_size,))
    b_hf = u(keys[3], (4 * hidden_size,))
    wi_r = u(keys[4], (4 * hidden_size, input_size))   # weight_ih_l0_reverse
    wh_r = u(keys[5], (4 * hidden_size, hidden_size))
    b_ir = u(keys[6], (4 * hidden_size,))
    b_hr = u(keys[7], (4 * hidden_size,))

    return dict(
        gamma=jnp.ones((1, input_size), jnp.float32),   # BatchNorm1d weight
        beta=jnp.zeros((1, input_size), jnp.float32),   # BatchNorm1d bias
        wi_f=wi_f.T, wh_f=wh_f.T, b_f=(b_if + b_hf).reshape(1, -1),
        wi_r=wi_r.T, wh_r=wh_r.T, b_r=(b_ir + b_hr).reshape(1, -1),
    )


def reference_forward(x, output_lengths, params):
    """Pure-JAX reference with identical numerics (BN folded into the weights,
    bf16 projection / recurrent-matmul operands, f32 state & gate math)."""
    T, N, F = x.shape
    H = params["wh_f"].shape[0]
    lengths = output_lengths.astype(jnp.int32).reshape(1, N)
    mask = (jnp.arange(T, dtype=jnp.int32)[:, None] < lengths)
    mask = mask.astype(jnp.float32)[..., None]                  # (T, N, 1)

    gamma = params["gamma"].reshape(F)
    beta = params["beta"].reshape(F)
    mean = jnp.mean(x, axis=(0, 1))
    var = jnp.mean(jnp.square(x - mean), axis=(0, 1))
    scale = gamma * jax.lax.rsqrt(var + EPS)
    shift = beta - mean * scale

    wi = jnp.concatenate([params["wi_f"], params["wi_r"]], axis=1)
    b = jnp.concatenate([params["b_f"], params["b_r"]], axis=1)
    wi_fold = (scale[:, None] * wi).astype(jnp.bfloat16)
    b_fold = shift[None, :] @ wi + b

    pre = jnp.dot(x.reshape(T * N, F).astype(jnp.bfloat16), wi_fold,
                  preferred_element_type=jnp.float32) + b_fold
    pre = pre.reshape(T, N, 8 * H)
    pre_f, pre_r = pre[..., :4 * H], pre[..., 4 * H:]

    def run_dir(pre_d, wh, reverse):
        wh_bf = wh.astype(jnp.bfloat16)
        p, m = (pre_d[::-1], mask[::-1]) if reverse else (pre_d, mask)

        def step(carry, inp):
            h, c = carry
            pre_t, m_t = inp
            g = pre_t + jnp.dot(h.astype(jnp.bfloat16), wh_bf,
                                preferred_element_type=jnp.float32)
            i = jax.nn.sigmoid(g[:, :H]); f = jax.nn.sigmoid(g[:, H:2 * H])
            gg = jnp.tanh(g[:, 2 * H:3 * H]); o = jax.nn.sigmoid(g[:, 3 * H:])
            c_new = f * c + i * gg
            h_new = o * jnp.tanh(c_new)
            h = h + m_t * (h_new - h)
            c = c + m_t * (c_new - c)
            return (h, c), m_t * h + (1.0 - m_t) * BLANK_LABEL

        (_, _), outs = jax.lax.scan(
            step,
            (jnp.zeros((N, H), jnp.float32), jnp.zeros((N, H), jnp.float32)),
            (p, m))
        return outs[::-1] if reverse else outs

    return (run_dir(pre_f, params["wh_f"], False)
            + run_dir(pre_r, params["wh_r"], True))


if __name__ == "__main__":
    T, N, F, H = 8, 2, 16, 32
    key = jax.random.PRNGKey(0)
    kx, kp = jax.random.split(key)

    x = jax.random.normal(kx, (T, N, F), jnp.float32)
    output_lengths = jnp.array([8, 6], jnp.int32)   # sorted (enforce_sorted)
    params = init_params(kp, F, H)

    out = batch_rnn_forward(x, output_lengths, params)
    out = jax.block_until_ready(out)

    ref = reference_forward(x, output_lengths, params)
    assert out.shape == (T, N, H)
    err = float(jnp.max(jnp.abs(out - ref)))
    assert err < 2e-3, err
    print("KERNEL_OK")
</pallas_src>

<mosaic_0001>
module attributes {stable_mosaic.version = 11 : i64} {
  func.func @_proj_kernel(%arg0: i32, %arg1: memref<32x16xbf16, #tpu.memory_space<vmem>>, %arg2: memref<16x1024xbf16, #tpu.memory_space<vmem>>, %arg3: memref<1x1024xf32, #tpu.memory_space<vmem>>, %arg4: memref<32x1024xf32, #tpu.memory_space<vmem>>) attributes {dimension_semantics = [#tpu.dimension_semantics<parallel>], iteration_bounds = array<i64: 2>, scalar_prefetch = 0 : i64, scratch_operands = 0 : i64, tpu.core_type = #tpu.core_type<tc>, window_params = [{transform_indices = @transform_0, window_bounds = array<i64: 32, 16>}, {pipeline_mode = #tpu.pipeline_mode<synchronous>, transform_indices = @transform_1, window_bounds = array<i64: 16, 1024>}, {pipeline_mode = #tpu.pipeline_mode<synchronous>, transform_indices = @transform_2, window_bounds = array<i64: 1, 1024>}, {transform_indices = @transform_3, window_bounds = array<i64: 32, 1024>}]} {
    %c0 = arith.constant 0 : index
    %c0_0 = arith.constant 0 : index
    %0 = vector.load %arg1[%c0, %c0_0] : memref<32x16xbf16, #tpu.memory_space<vmem>>, vector<32x16xbf16>
    %c0_1 = arith.constant 0 : index
    %c0_2 = arith.constant 0 : index
    %1 = vector.load %arg2[%c0_1, %c0_2] : memref<16x1024xbf16, #tpu.memory_space<vmem>>, vector<16x1024xbf16>
    %cst = arith.constant dense<0.000000e+00> : vector<32x1024xf32>
    %2 = tpu.matmul %0, %1, %cst {dimension_numbers = #tpu.dot_dimension_numbers<[1], [0], [0], [1], [0, 0, 1, 1], [], []>} : vector<32x16xbf16>, vector<16x1024xbf16>, vector<32x1024xf32> -> vector<32x1024xf32>
    %c0_3 = arith.constant 0 : index
    %c0_4 = arith.constant 0 : index
    %3 = vector.load %arg3[%c0_3, %c0_4] : memref<1x1024xf32, #tpu.memory_space<vmem>>, vector<1x1024xf32>
    %4 = vector.broadcast %3 : vector<1x1024xf32> to vector<32x1024xf32>
    %5 = arith.addf %2, %4 : vector<32x1024xf32>
    %c0_5 = arith.constant 0 : index
    %c0_6 = arith.constant 0 : index
    %6 = vector.load %arg4[%c0_5, %c0_6] : memref<32x1024xf32, #tpu.memory_space<vmem>>, vector<32x1024xf32>
    tpu.vector_store %arg4[%c0_5, %c0_6], %5 {strides = array<i32>} : memref<32x1024xf32, #tpu.memory_space<vmem>>, vector<32x1024xf32>,
    return
  }
  func.func @transform_0(%arg0: i32) -> (i32, i32) {
    %c0_i32 = arith.constant 0 : i32
    %c0_i32_0 = arith.constant 0 : i32
    return %arg0, %c0_i32 : i32, i32
  }
  func.func @transform_1(%arg0: i32) -> (i32, i32) {
    %c0_i32 = arith.constant 0 : i32
    %c0_i32_0 = arith.constant 0 : i32
    %c0_i32_1 = arith.constant 0 : i32
    return %c0_i32, %c0_i32_0 : i32, i32
  }
  func.func @transform_2(%arg0: i32) -> (i32, i32) {
    %c0_i32 = arith.constant 0 : i32
    %c0_i32_0 = arith.constant 0 : i32
    %c0_i32_1 = arith.constant 0 : i32
    return %c0_i32, %c0_i32_0 : i32, i32
  }
  func.func @transform_3(%arg0: i32) -> (i32, i32) {
    %c0_i32 = arith.constant 0 : i32
    %c0_i32_0 = arith.constant 0 : i32
    return %arg0, %c0_i32 : i32, i32
  }
}

</mosaic_0001>

<llo_original>
// kernel: tpu_custom_call.1
$region0: #{tpu_custom_call.1}
  #allocation0 [shape = 'u32[]', space=smem, size = 0x4, offset = 0x4, fixed_abs, tag = 'smem constant byte address 0x4 - core index']
  #allocation1 [shape = 'u32[72,128]{1,0:T(1,128)}', space=vmem, size = 0x9000, scoped, tag = 'internal scratch']
  %s0 = inlined_call_operand.vmem [shape: bf16[64,16], index: 0, kind: input, shape index: {}]
  %s1 = inlined_call_operand.hbm [shape: bf16[16,1024], index: 1, kind: input, shape index: {}]
  %s2 = inlined_call_operand.vmem [shape: f32[1,1024], index: 2, kind: input, shape index: {}]
  %s3 = inlined_call_operand.hbm [shape: f32[64,1024], index: 3, kind: output, shape index: {}]
  %s4 = sld [smem:[#allocation0]]
  $region49: #{tpu_custom_call.1} parent=0
    _
  %s6 = ssub.s32 1, %s4
  %s7 = scalar_select 0, %s6, %s4
  $region1: #{tpu_custom_call.1} parent=0
    #allocation2 [shape = 'u8[32768]{0}', space=vmem, size = 0x8000, scoped, tag = 'input window, operand 1, single buffered']
    #allocation3 [shape = 's32[2]{0}', space=sflag, size = 0x8, scoped, tag = 'scoped memory for tpu_custom_call.1']
    #allocation4 [shape = 's32[2]{0}', space=sflag, size = 0x8, scoped, tag = 'scoped memory for tpu_custom_call.1']
    #allocation5 [shape = 'u8[262144]{0}', space=vmem, size = 0x40000, scoped, tag = 'output window, operand 0']
    %8 = vsyncpa [#allocation3], 0
    %9 = vsyncpa [#allocation4], 0
    %s10 = scalar_lea.sflag [#allocation4], 1
    %11 = vsyncpa %s10, 0
    loop: start=0, step=1, limit=4
    $region2: #{tpu_custom_call.1} parent=1 // loop_pre_header
      _
    $region3: #{tpu_custom_call.1} parent=1 // loop_header
      %s13 = sphi 0, %s17
      %p14 = scmp.ge.s32.totalorder %s13, 4
      %s23 = sphi 0, %s25
      %s26 = sphi 0, %s23
      %s27 = sphi 0, %s26
      %s43 = sphi 0, %s27
      %s47 = sphi 0, %s47
      %s49 = sphi 0, %s47
      %s50 = sphi 0, %s49
      %s64 = sphi 0, %s50
      %s68 = sphi 0, %s68
      %s70 = sphi 0, %s68
      %s71 = sphi 0, %s70
      %s85 = sphi 0, %s71
      %s91 = sphi 0, %s93
      %s94 = sphi 0, %s91
      %s95 = sphi 0, %s94
      %s111 = sphi 0, %s95
    $region4: #{tpu_custom_call.1} parent=1 // loop_header_branch
      %16 = sbr.rel (%p14) target = $region8
    $region5: #{tpu_custom_call.1} parent=1 // loop_body
      %s18 = ssub.s32 %s13, 1
      %s19 = ssub.s32 %s13, 2
      %s20 = sadd.s32 %s13, 1
      %s21 = ssub.s32 %s13, %s20
      %p22 = scmp.eq.s32.totalorder %s21, 0
      %s24 = sadd.s32 %s23, 1
      %s25 = scalar_select %p22, %s23, %s24
      %p28 = pneg %p22
      %p29 = scmp.eq.s32.totalorder %s13, 1
      %p30 = por %p28, %p29
      %p31 = scmp.ne.s32.totalorder %s23, %s26
      %p32 = scmp.eq.s32.totalorder %s13, 0
      %p33 = por %p31, %p32
      %p34 = scmp.ne.s32.totalorder %s23, %s26
      %p35 = scmp.eq.s32.totalorder %s18, 1
      %p36 = por %p34, %p35
      %p37 = scmp.ne.s32.totalorder %s26, %s27
      %p38 = scmp.eq.s32.totalorder %s18, 0
      %p39 = por %p37, %p38
      %p40 = scmp.ne.s32.totalorder %s26, %s27
      %p41 = scmp.eq.s32.totalorder %s19, 1
      %p42 = por %p40, %p41
      %p44 = scmp.ne.s32.totalorder %s27, %s43
      %p45 = scmp.eq.s32.totalorder %s19, 0
      %p46 = por %p44, %p45
      %s48 = sadd.s32 %s47, 1
      %p51 = scmp.eq.s32.totalorder %s13, 1
      %p52 = scmp.ne.s32.totalorder %s47, %s49
      %p53 = scmp.eq.s32.totalorder %s13, 0
      %p54 = por %p52, %p53
      %p55 = scmp.ne.s32.totalorder %s47, %s49
      %p56 = scmp.eq.s32.totalorder %s18, 1
      %p57 = por %p55, %p56
      %p58 = scmp.ne.s32.totalorder %s49, %s50
      %p59 = scmp.eq.s32.totalorder %s18, 0
      %p60 = por %p58, %p59
      %p61 = scmp.ne.s32.totalorder %s49, %s50
      %p62 = scmp.eq.s32.totalorder %s19, 1
      %p63 = por %p61, %p62
      %p65 = scmp.ne.s32.totalorder %s50, %s64
      %p66 = scmp.eq.s32.totalorder %s19, 0
      %p67 = por %p65, %p66
      %s69 = sadd.s32 %s68, 1
      %p72 = scmp.eq.s32.totalorder %s13, 1
      %p73 = scmp.ne.s32.totalorder %s68, %s70
      %p74 = scmp.eq.s32.totalorder %s13, 0
      %p75 = por %p73, %p74
      %p76 = scmp.ne.s32.totalorder %s68, %s70
      %p77 = scmp.eq.s32.totalorder %s18, 1
      %p78 = por %p76, %p77
      %p79 = scmp.ne.s32.totalorder %s70, %s71
      %p80 = scmp.eq.s32.totalorder %s18, 0
      %p81 = por %p79, %p80
      %p82 = scmp.ne.s32.totalorder %s70, %s71
      %p83 = scmp.eq.s32.totalorder %s19, 1
      %p84 = por %p82, %p83
      %p86 = scmp.ne.s32.totalorder %s71, %s85
      %p87 = scmp.eq.s32.totalorder %s19, 0
      %p88 = por %p86, %p87
      %s89 = ssub.s32 %s13, %s20
      %p90 = scmp.eq.s32.totalorder %s89, 0
      %s92 = sadd.s32 %s91, 1
      %s93 = scalar_select %p90, %s91, %s92
      %p96 = pneg %p90
      %p97 = scmp.eq.s32.totalorder %s13, 1
      %p98 = por %p96, %p97
      %p99 = scmp.ne.s32.totalorder %s91, %s94
      %p100 = scmp.eq.s32.totalorder %s13, 0
      %p101 = por %p99, %p100
      %p102 = scmp.ne.s32.totalorder %s91, %s94
      %p103 = scmp.eq.s32.totalorder %s18, 1
      %p104 = por %p102, %p103
      %p105 = scmp.ne.s32.totalorder %s94, %s95
      %p106 = scmp.eq.s32.totalorder %s18, 0
      %p107 = por %p105, %p106
      %p108 = scmp.ne.s32.totalorder %s94, %s95
      %p109 = scmp.eq.s32.totalorder %s19, 1
      %p110 = por %p108, %p109
      %p112 = scmp.ne.s32.totalorder %s95, %s111
      %p113 = scmp.eq.s32.totalorder %s19, 0
      %p114 = por %p112, %p113
      %p115 = scmp.le.s32.totalorder 1, %s13
      %p116 = scmp.lt.s32.totalorder %s13, 3
      %p117 = pnand %p115, %p116
      %p118 = pneg %p117
      // Predicated region
      $region9: #{tpu_custom_call.1} parent=5 // pred_check
        _
      $region10: #{tpu_custom_call.1} parent=5 // pred_check_branch
        %120 = sbr.rel (%p117) target = $region12
      $region11: #{tpu_custom_call.1} parent=5 // pred_region
        %s121 = ssub.s32 %s13, 1
        // Predicated region
        $region13: #{tpu_custom_call.1} parent=11 // pred_check
          %p122 = pneg %p60
        $region14: #{tpu_custom_call.1} parent=11 // pred_check_branch
          %124 = sbr.rel (%p122) target = $region16
        $region15: #{tpu_custom_call.1} parent=11 // pred_region
          %126 = vsyncadd [#allocation3], 0
          %s127 = sshll.u32 %s1, 4
          %s128 = int_to_ptr.hbm [resolvable:$true] %s127
          %s129 = sshll.u32 [#allocation2], 4
          %s130 = int_to_ptr.vmem [resolvable:$true] %s129
          %135 = dma.hbm_to_vmem [thread:$0]  %s128, 1024, %s130, [#allocation3], 512, 512, 32
        $region16: #{tpu_custom_call.1} parent=11 // pred_fallthru
          _
        // Predicated region
        $region17: #{tpu_custom_call.1} parent=11 // pred_check
          %p136 = pneg %p81
        $region18: #{tpu_custom_call.1} parent=11 // pred_check_branch
          %138 = sbr.rel (%p136) target = $region20
        $region19: #{tpu_custom_call.1} parent=11 // pred_region
          _
        $region20: #{tpu_custom_call.1} parent=11 // pred_fallthru
          _
      $region12: #{tpu_custom_call.1} parent=5 // pred_fallthru
        _
      %p139 = scmp.lt.s32.totalorder %s13, 2
      // Predicated region
      $region21: #{tpu_custom_call.1} parent=5 // pred_check
        %p140 = pneg %p139
      $region22: #{tpu_custom_call.1} parent=5 // pred_check_branch
        %142 = sbr.rel (%p140) target = $region24
      $region23: #{tpu_custom_call.1} parent=5 // pred_region
        // Predicated region
        $region25: #{tpu_custom_call.1} parent=23 // pred_check
          %p143 = pneg %p33
        $region26: #{tpu_custom_call.1} parent=23 // pred_check_branch
          %145 = sbr.rel (%p143) target = $region28
        $region27: #{tpu_custom_call.1} parent=23 // pred_region
          %s146 = smul.u32 4, %s13
          %p147 = scmp.lt.s32.totalorder %s146, 7
          %s148 = scalar_select %p147, %s146, 7
          %s149 = smul.addr %s148, 4
          %s150 = scalar_lea.vmem %s0, %s149
          %s151 = smul.u32 4, %s13
        $region28: #{tpu_custom_call.1} parent=23 // pred_fallthru
          _
      $region24: #{tpu_custom_call.1} parent=5 // pred_fallthru
        _
      %p152 = scmp.le.s32.totalorder 1, %s13
      %p153 = scmp.lt.s32.totalorder %s13, 3
      %p154 = pnand %p152, %p153
      %p155 = pneg %p154
      // Predicated region
      $region29: #{tpu_custom_call.1} parent=5 // pred_check
        _
      $region30: #{tpu_custom_call.1} parent=5 // pred_check_branch
        %157 = sbr.rel (%p154) target = $region32
      $region31: #{tpu_custom_call.1} parent=5 // pred_region
        %s158 = ssub.s32 %s13, 1
        // Predicated region
        $region33: #{tpu_custom_call.1} parent=31 // pred_check
          %p159 = pneg %p60
        $region34: #{tpu_custom_call.1} parent=31 // pred_check_branch
          %161 = sbr.rel (%p159) target = $region36
        $region35: #{tpu_custom_call.1} parent=31 // pred_region
          %163 = dma.done [#allocation3], 1024
        $region36: #{tpu_custom_call.1} parent=31 // pred_fallthru
          _
        %s164 = smul.u32 4, %s18
        %p165 = scmp.lt.s32.totalorder %s164, 7
        %s166 = scalar_select %p165, %s164, 7
        %s167 = smul.addr %s166, 4
        %s168 = scalar_lea.vmem %s0, %s167
        %p169 = pneg %p39
        %p170 = pneg %p36
        %p171 = pneg %p60
        %p172 = pneg %p57
        %p173 = pneg %p81
        %p174 = pneg %p78
        %p175 = pneg %p107
        %p176 = pneg %p104
        %s177 = sand.u32 %s94, 1
        %s178 = scalar_lea.sflag [#allocation4], %s177
        %s179 = sand.u32 %s94, 1
        %s180 = smul.addr %s179, 256
        %s181 = scalar_lea.vmem [#allocation5], %s180
        %s182 = smul.u32 4, %s18
        %p183 = scmp.lt.s32.totalorder %s182, 7
        %s184 = scalar_select %p183, %s182, 7
        %s185 = smul.addr %s184, 4
        %s186 = scalar_lea.vmem %s0, %s185
        %s187 = smul.u32 4, %s18
        %s188 = smul.u32 4, %s18
        %v190 = vld [vmem:[%s186] sm:$0xf]
        %v191 = vld [vmem:[%s186 + $0x4] sm:$0xf]
        %v192 = vld [vmem:[%s186 + $0x8] sm:$0xf]
        %v193 = vld [vmem:[%s186 + $0xc] sm:$0xf]
        %v194 = vld [vmem:[#allocation2] sm:$0xff]
        %v195 = vld [vmem:[#allocation2 + $0x8] sm:$0xff]
        %v196 = vld [vmem:[#allocation2 + $0x10] sm:$0xff]
        %v197 = vld [vmem:[#allocation2 + $0x18] sm:$0xff]
        %v198 = vld [vmem:[#allocation2 + $0x20] sm:$0xff]
        %v199 = vld [vmem:[#allocation2 + $0x28] sm:$0xff]
        %v200 = vld [vmem:[#allocation2 + $0x30] sm:$0xff]
        %v201 = vld [vmem:[#allocation2 + $0x38] sm:$0xff]
        %v202 = vld [vmem:[%s2] sm:$0xff]
        %v204 = vperm.slane %v202, 0
        %v205 = vperm.slane %v202, 1
        %v206 = vperm.slane %v202, 2
        %v207 = vperm.slane %v202, 3
        %v208 = vperm.slane %v202, 4
        %v209 = vperm.slane %v202, 5
        %v210 = vperm.slane %v202, 6
        %v211 = vperm.slane %v202, 7
        %v224 = vunpack.c.l.b16 %v190
        %v225 = vunpack.c.l.b16 %v191
        %v226 = vunpack.c.l.b16 %v192
        %v227 = vunpack.c.l.b16 %v193
        %v228 = vpack.c.b16 %v225, %v224
        %v229 = vpack.c.b16 %v227, %v226
        %v238 = vunpack.c.l.b16 %v194
        %v239 = vunpack.c.h.b16 %v194
        %v240 = vunpack.c.l.b16 %v195
        %v241 = vunpack.c.h.b16 %v195
        %v242 = vunpack.c.l.b16 %v196
        %v243 = vunpack.c.h.b16 %v196
        %v244 = vunpack.c.l.b16 %v197
        %v245 = vunpack.c.h.b16 %v197
        %v246 = vunpack.c.l.b16 %v198
        %v247 = vunpack.c.h.b16 %v198
        %v248 = vunpack.c.l.b16 %v199
        %v249 = vunpack.c.h.b16 %v199
        %v250 = vunpack.c.l.b16 %v200
        %v251 = vunpack.c.h.b16 %v200
        %v252 = vunpack.c.l.b16 %v201
        %v253 = vunpack.c.h.b16 %v201
        %v254 = vpack.c.b16 %v246, %v238
        %v255 = vpack.c.b16 %v247, %v239
        %v256 = vpack.c.b16 %v248, %v240
        %v257 = vpack.c.b16 %v249, %v241
        %v258 = vpack.c.b16 %v250, %v242
        %v259 = vpack.c.b16 %v251, %v243
        %v260 = vpack.c.b16 %v252, %v244
        %v261 = vpack.c.b16 %v253, %v245
        %vm270 = vcmask 130048
        %v272 = vsel %vm270, %v228, 0
        %v275 = vsel %vm270, %v229, 0
        %277 = vmatpush.bf16.msra.mxu0 0
        %278 = vmatpush.bf16.msra.mxu0 0
        %279 = vmatpush.bf16.msra.mxu0 0
        %280 = vmatpush.bf16.msra.mxu0 0
        %281 = vmatpush.bf16.msra.mxu0 0
        %282 = vmatpush.bf16.msra.mxu0 0
        %283 = vmatpush.bf16.msra.mxu0 0
        %284 = vmatpush.bf16.msra.mxu0 %v254
        %285 = vmatmul.bf16.gmra.mxu0 %v272
        %v286 = vpop.f32.mrf.mxu0
        %v287 = vadd.f32 %v204, %v286
        %v288 = vpop.f32.mrf.mxu0
        %v289 = vadd.f32 %v204, %v288
        %290 = vmatmul.bf16.gmra.mxu0 %v275
        %v291 = vpop.f32.mrf.mxu0
        %v292 = vadd.f32 %v204, %v291
        %v293 = vpop.f32.mrf.mxu0
        %v294 = vadd.f32 %v204, %v293
        %295 = vdwg.mxu0
        %296 = vmatpush.bf16.msra.mxu0 0
        %297 = vmatpush.bf16.msra.mxu0 0
        %298 = vmatpush.bf16.msra.mxu0 0
        %299 = vmatpush.bf16.msra.mxu0 0
        %300 = vmatpush.bf16.msra.mxu0 0
        %301 = vmatpush.bf16.msra.mxu0 0
        %302 = vmatpush.bf16.msra.mxu0 0
        %303 = vmatpush.bf16.msra.mxu0 %v255
        %304 = vmatmul.bf16.gmra.mxu0 %v272
        %v305 = vpop.f32.mrf.mxu0
        %v306 = vadd.f32 %v205, %v305
        %v307 = vpop.f32.mrf.mxu0
        %v308 = vadd.f32 %v205, %v307
        %309 = vmatmul.bf16.gmra.mxu0 %v275
        %v310 = vpop.f32.mrf.mxu0
        %v311 = vadd.f32 %v205, %v310
        %v312 = vpop.f32.mrf.mxu0
        %v313 = vadd.f32 %v205, %v312
        %314 = vdwg.mxu0
        %315 = vmatpush.bf16.msra.mxu0 0
        %316 = vmatpush.bf16.msra.mxu0 0
        %317 = vmatpush.bf16.msra.mxu0 0
        %318 = vmatpush.bf16.msra.mxu0 0
        %319 = vmatpush.bf16.msra.mxu0 0
        %320 = vmatpush.bf16.msra.mxu0 0
        %321 = vmatpush.bf16.msra.mxu0 0
        %322 = vmatpush.bf16.msra.mxu0 %v256
        %323 = vmatmul.bf16.gmra.mxu0 %v272
        %v324 = vpop.f32.mrf.mxu0
        %v325 = vadd.f32 %v206, %v324
        %v326 = vpop.f32.mrf.mxu0
        %v327 = vadd.f32 %v206, %v326
        %328 = vmatmul.bf16.gmra.mxu0 %v275
        %v329 = vpop.f32.mrf.mxu0
        %v330 = vadd.f32 %v206, %v329
        %v331 = vpop.f32.mrf.mxu0
        %v332 = vadd.f32 %v206, %v331
        %333 = vdwg.mxu0
        %334 = vmatpush.bf16.msra.mxu0 0
        %335 = vmatpush.bf16.msra.mxu0 0
        %336 = vmatpush.bf16.msra.mxu0 0
        %337 = vmatpush.bf16.msra.mxu0 0
        %338 = vmatpush.bf16.msra.mxu0 0
        %339 = vmatpush.bf16.msra.mxu0 0
        %340 = vmatpush.bf16.msra.mxu0 0
        %341 = vmatpush.bf16.msra.mxu0 %v257
        %342 = vmatmul.bf16.gmra.mxu0 %v272
        %v343 = vpop.f32.mrf.mxu0
        %v344 = vadd.f32 %v207, %v343
        %v345 = vpop.f32.mrf.mxu0
        %v346 = vadd.f32 %v207, %v345
        %347 = vmatmul.bf16.gmra.mxu0 %v275
        %v348 = vpop.f32.mrf.mxu0
        %v349 = vadd.f32 %v207, %v348
        %v350 = vpop.f32.mrf.mxu0
        %v351 = vadd.f32 %v207, %v350
        %352 = vdwg.mxu0
        %353 = vmatpush.bf16.msra.mxu0 0
        %354 = vmatpush.bf16.msra.mxu0 0
        %355 = vmatpush.bf16.msra.mxu0 0
        %356 = vmatpush.bf16.msra.mxu0 0
        %357 = vmatpush.bf16.msra.mxu0 0
        %358 = vmatpush.bf16.msra.mxu0 0
        %359 = vmatpush.bf16.msra.mxu0 0
        %360 = vmatpush.bf16.msra.mxu0 %v258
        %361 = vmatmul.bf16.gmra.mxu0 %v272
        %v362 = vpop.f32.mrf.mxu0
        %v363 = vadd.f32 %v208, %v362
        %v364 = vpop.f32.mrf.mxu0
        %v365 = vadd.f32 %v208, %v364
        %366 = vmatmul.bf16.gmra.mxu0 %v275
        %v367 = vpop.f32.mrf.mxu0
        %v368 = vadd.f32 %v208, %v367
        %v369 = vpop.f32.mrf.mxu0
        %v370 = vadd.f32 %v208, %v369
        %371 = vdwg.mxu0
        %372 = vmatpush.bf16.msra.mxu0 0
        %373 = vmatpush.bf16.msra.mxu0 0
        %374 = vmatpush.bf16.msra.mxu0 0
        %375 = vmatpush.bf16.msra.mxu0 0
        %376 = vmatpush.bf16.msra.mxu0 0
        %377 = vmatpush.bf16.msra.mxu0 0
        %378 = vmatpush.bf16.msra.mxu0 0
        %379 = vmatpush.bf16.msra.mxu0 %v259
        %380 = vmatmul.bf16.gmra.mxu0 %v272
        %v381 = vpop.f32.mrf.mxu0
        %v382 = vadd.f32 %v209, %v381
        %v383 = vpop.f32.mrf.mxu0
        %v384 = vadd.f32 %v209, %v383
        %385 = vmatmul.bf16.gmra.mxu0 %v275
        %v386 = vpop.f32.mrf.mxu0
        %v387 = vadd.f32 %v209, %v386
        %v388 = vpop.f32.mrf.mxu0
        %v389 = vadd.f32 %v209, %v388
        %390 = vdwg.mxu0
        %391 = vmatpush.bf16.msra.mxu0 0
        %392 = vmatpush.bf16.msra.mxu0 0
        %393 = vmatpush.bf16.msra.mxu0 0
        %394 = vmatpush.bf16.msra.mxu0 0
        %395 = vmatpush.bf16.msra.mxu0 0
        %396 = vmatpush.bf16.msra.mxu0 0
        %397 = vmatpush.bf16.msra.mxu0 0
        %398 = vmatpush.bf16.msra.mxu0 %v260
        %399 = vmatmul.bf16.gmra.mxu0 %v272
        %v400 = vpop.f32.mrf.mxu0
        %v401 = vadd.f32 %v210, %v400
        %v402 = vpop.f32.mrf.mxu0
        %v403 = vadd.f32 %v210, %v402
        %404 = vmatmul.bf16.gmra.mxu0 %v275
        %v405 = vpop.f32.mrf.mxu0
        %v406 = vadd.f32 %v210, %v405
        %v407 = vpop.f32.mrf.mxu0
        %v408 = vadd.f32 %v210, %v407
        %409 = vdwg.mxu0
        %410 = vmatpush.bf16.msra.mxu0 0
        %411 = vmatpush.bf16.msra.mxu0 0
        %412 = vmatpush.bf16.msra.mxu0 0
        %413 = vmatpush.bf16.msra.mxu0 0
        %414 = vmatpush.bf16.msra.mxu0 0
        %415 = vmatpush.bf16.msra.mxu0 0
        %416 = vmatpush.bf16.msra.mxu0 0
        %417 = vmatpush.bf16.msra.mxu0 %v261
        %418 = vmatmul.bf16.gmra.mxu0 %v272
        %v419 = vpop.f32.mrf.mxu0
        %v420 = vadd.f32 %v211, %v419
        %v421 = vpop.f32.mrf.mxu0
        %v422 = vadd.f32 %v211, %v421
        %423 = vmatmul.bf16.gmra.mxu0 %v275
        %v424 = vpop.f32.mrf.mxu0
        %v425 = vadd.f32 %v211, %v424
        %v426 = vpop.f32.mrf.mxu0
        %v427 = vadd.f32 %v211, %v426
        %428 = vdwg.mxu0
        %429 = vst [vmem:[%s181] sm:$0xff] %v287
        %430 = vst [vmem:[%s181 + $0x8] sm:$0xff] %v306
        %431 = vst [vmem:[%s181 + $0x10] sm:$0xff] %v325
        %432 = vst [vmem:[%s181 + $0x18] sm:$0xff] %v344
        %433 = vst [vmem:[%s181 + $0x20] sm:$0xff] %v363
        %434 = vst [vmem:[%s181 + $0x28] sm:$0xff] %v382
        %435 = vst [vmem:[%s181 + $0x30] sm:$0xff] %v401
        %436 = vst [vmem:[%s181 + $0x38] sm:$0xff] %v420
        %437 = vst [vmem:[%s181 + $0x40] sm:$0xff] %v289
        %438 = vst [vmem:[%s181 + $0x48] sm:$0xff] %v308
        %439 = vst [vmem:[%s181 + $0x50] sm:$0xff] %v327
        %440 = vst [vmem:[%s181 + $0x58] sm:$0xff] %v346
        %441 = vst [vmem:[%s181 + $0x60] sm:$0xff] %v365
        %442 = vst [vmem:[%s181 + $0x68] sm:$0xff] %v384
        %443 = vst [vmem:[%s181 + $0x70] sm:$0xff] %v403
        %444 = vst [vmem:[%s181 + $0x78] sm:$0xff] %v422
        %445 = vst [vmem:[%s181 + $0x80] sm:$0xff] %v292
        %446 = vst [vmem:[%s181 + $0x88] sm:$0xff] %v311
        %447 = vst [vmem:[%s181 + $0x90] sm:$0xff] %v330
        %448 = vst [vmem:[%s181 + $0x98] sm:$0xff] %v349
        %449 = vst [vmem:[%s181 + $0xa0] sm:$0xff] %v368
        %450 = vst [vmem:[%s181 + $0xa8] sm:$0xff] %v387
        %451 = vst [vmem:[%s181 + $0xb0] sm:$0xff] %v406
        %452 = vst [vmem:[%s181 + $0xb8] sm:$0xff] %v425
        %453 = vst [vmem:[%s181 + $0xc0] sm:$0xff] %v294
        %454 = vst [vmem:[%s181 + $0xc8] sm:$0xff] %v313
        %455 = vst [vmem:[%s181 + $0xd0] sm:$0xff] %v332
        %456 = vst [vmem:[%s181 + $0xd8] sm:$0xff] %v351
        %457 = vst [vmem:[%s181 + $0xe0] sm:$0xff] %v370
        %458 = vst [vmem:[%s181 + $0xe8] sm:$0xff] %v389
        %459 = vst [vmem:[%s181 + $0xf0] sm:$0xff] %v408
        %460 = vst [vmem:[%s181 + $0xf8] sm:$0xff] %v427
        %s461 = sand.u32 %s94, 1
        %s462 = scalar_lea.sflag [#allocation4], %s461
        %s463 = sand.u32 %s94, 1
        %s464 = smul.addr %s463, 256
        %s465 = scalar_lea.vmem [#allocation5], %s464
        // Predicated region
        $region37: #{tpu_custom_call.1} parent=31 // pred_check
          %p466 = pneg %p104
        $region38: #{tpu_custom_call.1} parent=31 // pred_check_branch
          %468 = sbr.rel (%p466) target = $region40
        $region39: #{tpu_custom_call.1} parent=31 // pred_region
          %s469 = smul.u32 4, %s18
          %471 = vsyncadd %s462, 0
          %s472 = smul.addr %s469, 8
          %s473 = smul.addr %s472, 8
          %s474 = scalar_lea.hbm %s3, %s473
          %s475 = sshll.u32 %s465, 4
          %s476 = int_to_ptr.vmem [resolvable:$true] %s475
          %s477 = sshll.u32 %s474, 4
          %s478 = int_to_ptr.hbm [resolvable:$true] %s477
          %483 = dma.vmem_to_hbm [thread:$0]  %s476, 4096, %s478, %s462, 1024, 1024, 64
        $region40: #{tpu_custom_call.1} parent=31 // pred_fallthru
          _
      $region32: #{tpu_custom_call.1} parent=5 // pred_fallthru
        _
      %p484 = scmp.le.s32.totalorder 2, %s13
      // Predicated region
      $region41: #{tpu_custom_call.1} parent=5 // pred_check
        %p485 = pneg %p484
      $region42: #{tpu_custom_call.1} parent=5 // pred_check_branch
        %487 = sbr.rel (%p485) target = $region44
      $region43: #{tpu_custom_call.1} parent=5 // pred_region
        %s488 = ssub.s32 %s13, 2
        // Predicated region
        $region45: #{tpu_custom_call.1} parent=43 // pred_check
          %p489 = pneg %p110
        $region46: #{tpu_custom_call.1} parent=43 // pred_check_branch
          %491 = sbr.rel (%p489) target = $region48
        $region47: #{tpu_custom_call.1} parent=43 // pred_region
          %s492 = sand.u32 %s95, 1
          %s493 = scalar_lea.sflag [#allocation4], %s492
          %s494 = sand.u32 %s95, 1
          %s495 = smul.addr %s494, 256
          %s496 = scalar_lea.vmem [#allocation5], %s495
          %498 = dma.done %s493, 4096
        $region48: #{tpu_custom_call.1} parent=43 // pred_fallthru
          _
      $region44: #{tpu_custom_call.1} parent=5 // pred_fallthru
        _
    $region6: #{tpu_custom_call.1} parent=1 // loop_footer
      %s17 = sadd.s32 1, %s13
    $region7: #{tpu_custom_call.1} parent=1 // loop_footer_branch
      %12 = sbr.rel target = $region3
    $region8: #{tpu_custom_call.1} parent=1 // loop_exit
      _
    %499 = vsyncpa [#allocation3], 1
    %s500 = scalar_lea.sflag [#allocation3], 1
    %501 = vsyncpa %s500, 1
    %502 = vsyncpa [#allocation4], 1
    %s503 = scalar_lea.sflag [#allocation4], 1
    %504 = vsyncpa %s503, 1

</llo_original>
